<compile_context>
chip_gen: v5e
topology: v5e:2x2
jax: 0.10.0
libtpu: 0.0.40
codegen_flags: <defaults>
</compile_context>

<pallas_src>
import functools
import math

import jax
import jax.numpy as jnp
import numpy as np
from jax.experimental import pallas as pl
from jax.experimental.pallas import tpu as pltpu

EPS = 1e-5  # BaseModelArgs.norm_eps


def _vmem_limit_bytes():
    """Generation-aware scoped-VMEM limit: ~3/4 of physical capacity, capped at 100 MiB."""
    try:
        cap = pltpu.get_tpu_info().vmem_capacity_bytes
        return int(min(cap * 3 // 4, 100 * 1024 * 1024))
    except Exception:
        return 48 * 1024 * 1024          # safe fallback (fits v7x's 64 MiB physical VMEM)


VMEM_LIMIT = _vmem_limit_bytes()


def _pick_tile(n, candidates=(2048, 1024, 512, 256, 128)):
    for t in candidates:
        if n % t == 0:
            return t
    return n


def _pick_ffn_tile(inter, dim, vmem_limit):
    """Largest I-tile whose double-buffered bf16 (D,2t)+(t,D) weight tiles stay <~1/3 of VMEM."""
    budget = vmem_limit // 3
    for t in (2048, 1024, 512, 256, 128):
        if inter % t == 0 and 12 * dim * t <= budget:
            return t
    return inter


def _rmsnorm(x, w):
    var = jnp.mean(x * x, axis=-1, keepdims=True)
    return x * jax.lax.rsqrt(var + EPS) * w


# ---------------------------------------------------------------------------
# Pallas kernels
# ---------------------------------------------------------------------------
def attention_block_kernel(x_ref, cos_ref, sin_ref, anw_ref, wqkv_ref, wo_ref,
                           o_ref, attn_ref, *, n_head, head_dim):
    """h1 = x + Attention(RMSNorm(x)) for a single batch element.  grid = (B,)."""
    H = n_head * head_dim
    half = head_dim // 2

    x = x_ref[...][0].astype(jnp.float32)                                   # (S, D)
    S = x.shape[0]

    hn = _rmsnorm(x, anw_ref[...]).astype(jnp.bfloat16)
    # Fused QKV projection.  1/sqrt(head_dim) is pre-folded into the Q columns; the
    # per-head even/odd de-interleave (rotate-half layout) is pre-folded into Q and K.
    qkv = jnp.dot(hn, wqkv_ref[...], preferred_element_type=jnp.float32)    # (S, 3H)
    q, k, v = qkv[:, :H], qkv[:, H:2 * H], qkv[:, 2 * H:]

    # RoPE tables stay at (S, head_dim//2) bf16 in HBM/VMEM; math in f32 (v5e has no bf16 VPU).
    cos = cos_ref[...].astype(jnp.float32)
    sin = sin_ref[...].astype(jnp.float32)

    def rope(t):                               # t: (S, head_dim) in rotate-half layout
        t1, t2 = t[:, :half], t[:, half:]
        return jnp.concatenate([t1 * cos - t2 * sin, t2 * cos + t1 * sin], axis=-1)

    row = jax.lax.broadcasted_iota(jnp.int32, (S, S), 0)
    col = jax.lax.broadcasted_iota(jnp.int32, (S, S), 1)
    causal = row >= col

    # TODO(synk): flash-style KV tiling (online softmax) required at production S.
    for h in range(n_head):
        sl = slice(h * head_dim, (h + 1) * head_dim)
        qh = rope(q[:, sl]).astype(jnp.bfloat16)
        kh = rope(k[:, sl]).astype(jnp.bfloat16)
        vh = v[:, sl].astype(jnp.bfloat16)
        s = jnp.einsum('qd,kd->qk', qh, kh, preferred_element_type=jnp.float32)
        s = jnp.where(causal, s, -1e30)
        p = jnp.exp(s - jnp.max(s, axis=-1, keepdims=True))
        p = p * pl.reciprocal(jnp.sum(p, axis=-1, keepdims=True), approx=True)
        # write this head's output straight into the bf16 scratch slice (no concat).
        attn_ref[:, sl] = jnp.dot(p.astype(jnp.bfloat16), vh,
                                  preferred_element_type=jnp.float32).astype(jnp.bfloat16)

    y = jnp.dot(attn_ref[...], wo_ref[...], preferred_element_type=jnp.float32)
    o_ref[...] = (x + y)[None].astype(o_ref.dtype)


def ffn_block_kernel(h_ref, fnw_ref, w13_ref, w2_ref, o_ref, acc_ref, fn_ref, *, tile_i):
    """out = h + SwiGLU_FFN(RMSNorm(h)) over all B*S rows.  grid = (I // tile_i,)."""
    i = pl.program_id(0)

    @pl.when(i == 0)
    def _init():
        h = h_ref[...].astype(jnp.float32)                                  # (BS, D)
        acc_ref[...] = h
        fn_ref[...] = _rmsnorm(h, fnw_ref[...]).astype(jnp.bfloat16)

    fn = fn_ref[...]
    # single wide-N matmul producing [gate | up] for this I-tile, sliced in-register.
    gu = jnp.dot(fn, w13_ref[...], preferred_element_type=jnp.float32)      # (BS, 2*tI)
    g = gu[:, :tile_i]
    u = gu[:, tile_i:]
    f = (jax.nn.silu(g) * u).astype(jnp.bfloat16)
    acc_ref[...] += jnp.dot(f, w2_ref[...], preferred_element_type=jnp.float32)

    @pl.when(i == pl.num_programs(0) - 1)
    def _store():
        o_ref[...] = acc_ref[...].astype(o_ref.dtype)


def norm_logits_kernel(x_ref, nw_ref, wt_ref, o_ref, hn_ref):
    """Final RMSNorm (hoisted, computed once) + tied-embedding logits, one vocab tile per step."""
    j = pl.program_id(0)

    @pl.when(j == 0)
    def _norm():
        hn_ref[...] = _rmsnorm(x_ref[...].astype(jnp.float32),
                               nw_ref[...]).astype(jnp.bfloat16)

    o_ref[...] = jnp.dot(hn_ref[...], wt_ref[...],
                         preferred_element_type=jnp.float32).astype(o_ref.dtype)


# ---------------------------------------------------------------------------
# pallas_call wrappers
# ---------------------------------------------------------------------------
def run_attention_block(x, lp, cos_tab, sin_tab, n_head, head_dim):
    B, S, D = x.shape
    H = n_head * head_dim
    half = head_dim // 2
    kernel = functools.partial(attention_block_kernel, n_head=n_head, head_dim=head_dim)
    return pl.pallas_call(
        kernel,
        out_shape=jax.ShapeDtypeStruct((B, S, D), jnp.bfloat16),
        grid=(B,),
        in_specs=[
            pl.BlockSpec((1, S, D), lambda b: (b, 0, 0)),          # x
            pl.BlockSpec((S, half), lambda b: (0, 0)),             # cos (bf16, per-pair)
            pl.BlockSpec((S, half), lambda b: (0, 0)),             # sin (bf16, per-pair)
            pl.BlockSpec((1, D), lambda b: (0, 0)),                # attention_norm
            pl.BlockSpec((D, 3 * H), lambda b: (0, 0)),            # fused wqkv (bf16)
            pl.BlockSpec((H, D), lambda b: (0, 0)),                # wo (bf16)
        ],
        out_specs=pl.BlockSpec((1, S, D), lambda b: (b, 0, 0)),
        scratch_shapes=[pltpu.VMEM((S, H), jnp.bfloat16)],         # per-head output slab
        compiler_params=pltpu.CompilerParams(
            dimension_semantics=("parallel",),
            vmem_limit_bytes=VMEM_LIMIT),
    )(x, cos_tab, sin_tab, lp['attn_norm'], lp['wqkv'], lp['wo'])


def run_ffn_block(h, lp, tile_i):
    """SwiGLU FFN + residual over all B*S rows; each weight tile streams from HBM once."""
    B, S, D = h.shape
    BS = B * S
    h2 = h.reshape(BS, D)
    inter = lp['w2'].shape[0]
    n_tiles = inter // tile_i
    kernel = functools.partial(ffn_block_kernel, tile_i=tile_i)
    out = pl.pallas_call(
        kernel,
        out_shape=jax.ShapeDtypeStruct((BS, D), jnp.bfloat16),
        grid=(n_tiles,),
        in_specs=[
            pl.BlockSpec((BS, D), lambda i: (0, 0)),               # h1 (DMA'd once)
            pl.BlockSpec((1, D), lambda i: (0, 0)),                # ffn_norm
            pl.BlockSpec((D, 2 * tile_i), lambda i: (0, i)),       # fused [w1|w3] tile
            pl.BlockSpec((tile_i, D), lambda i: (i, 0)),           # w2 tile
        ],
        out_specs=pl.BlockSpec((BS, D), lambda i: (0, 0)),
        scratch_shapes=[pltpu.VMEM((BS, D), jnp.float32),          # residual / accumulator
                        pltpu.VMEM((BS, D), jnp.bfloat16)],        # RMS-normed FFN input
        compiler_params=pltpu.CompilerParams(
            dimension_semantics=("arbitrary",),
            vmem_limit_bytes=VMEM_LIMIT),
    )(h2, lp['ffn_norm'], lp['w13'], lp['w2'])
    return out.reshape(B, S, D)


def run_norm_logits(x, norm_w, emb_t):
    B, S, D = x.shape
    BS = B * S
    V = emb_t.shape[1]
    tV = _pick_tile(V)
    x2 = x.reshape(BS, D)
    out = pl.pallas_call(
        norm_logits_kernel,
        out_shape=jax.ShapeDtypeStruct((BS, V), jnp.float32),
        grid=(V // tV,),
        in_specs=[
            pl.BlockSpec((BS, D), lambda j: (0, 0)),
            pl.BlockSpec((1, D), lambda j: (0, 0)),
            pl.BlockSpec((D, tV), lambda j: (0, j)),
        ],
        out_specs=pl.BlockSpec((BS, tV), lambda j: (0, j)),
        scratch_shapes=[pltpu.VMEM((BS, D), jnp.bfloat16)],        # hoisted RMSNorm result
        compiler_params=pltpu.CompilerParams(
            dimension_semantics=("arbitrary",),
            vmem_limit_bytes=VMEM_LIMIT),
    )(x2, norm_w, emb_t)
    return out.reshape(B, S, V)


# ---------------------------------------------------------------------------
# Plain-JAX glue: embeddings, RoPE tables, parameters
# ---------------------------------------------------------------------------
def embed(inp, emb, cb_emb, codebook_size, num_codebooks):
    """BaseTransformer.embed — inp: (B, 1+num_codebooks, S) int32."""
    text = emb[inp[:, 0, :]]                                             # (B, S, D)
    offset = (jnp.arange(num_codebooks, dtype=inp.dtype) * codebook_size)[None, :, None]
    vq = cb_emb[inp[:, 1:, :] + offset]                                  # (B, nc, S, D)
    vq_sum = vq.sum(axis=1)                                              # (B, S, D)
    mask = inp[:, 1, :] == 0                                             # (B, S)
    vq_sum = jnp.where(mask[..., None], 0.0, vq_sum)
    return text + vq_sum


def make_rope_tables(seq_len, head_dim, base=10000):
    """bf16 (S, head_dim//2) cos/sin tables (torch precompute_freqs_cis caches bf16)."""
    half = head_dim // 2
    freqs = 1.0 / (base ** (np.arange(0, head_dim, 2)[:half].astype(np.float32) / head_dim))
    ang = np.outer(np.arange(seq_len, dtype=np.float32), freqs)          # (S, half)
    cos_h = jnp.asarray(np.cos(ang)).astype(jnp.bfloat16)
    sin_h = jnp.asarray(np.sin(ang)).astype(jnp.bfloat16)
    return cos_h, sin_h


def init_params(key, cfg):
    """Torch-layout float32 parameters (what the nn.Module would hold)."""
    D, nh, hd = cfg['dim'], cfg['n_head'], cfg['head_dim']
    I, V = cfg['intermediate_size'], cfg['vocab_size']
    nc, cb = cfg['num_codebooks'], cfg['codebook_size']
    std = 0.02                                                           # initializer_range
    keys = jax.random.split(key, 2 + 5 * cfg['n_layer'])
    emb = jax.random.normal(keys[0], (V, D), jnp.float32) * std
    cb_emb = jax.random.normal(keys[1], (cb * nc, D), jnp.float32) * std
    layers = []
    ki = 2
    for _ in range(cfg['n_layer']):
        layers.append(dict(
            wqkv=jax.random.normal(keys[ki + 0], (3 * nh * hd, D), jnp.float32) * std,
            wo=jax.random.normal(keys[ki + 1], (D, D), jnp.float32) * std,
            w1=jax.random.normal(keys[ki + 2], (I, D), jnp.float32) * std,
            w3=jax.random.normal(keys[ki + 3], (I, D), jnp.float32) * std,
            w2=jax.random.normal(keys[ki + 4], (D, I), jnp.float32) * std,
            attention_norm=jnp.ones((D,), jnp.float32),
            ffn_norm=jnp.ones((D,), jnp.float32),
        ))
        ki += 5
    return dict(emb=emb, cb_emb=cb_emb, layers=layers, norm=jnp.ones((D,), jnp.float32))


def prepare_kernel_params(params, cfg, tile_i):
    """Kernel layout: pre-transposed bf16 weights, attention scale folded into Q columns,
    rotate-half de-interleave folded into Q/K columns, w1/w3 fused per I-tile."""
    # TODO(synk): fp8 (v7x) / int8 (v5e,v6e) weight-only quantisation of w13/w2/emb_t.
    nh, hd = cfg['n_head'], cfg['head_dim']
    D, I = cfg['dim'], cfg['intermediate_size']
    H = nh * hd
    n_tiles = I // tile_i
    scale = 1.0 / math.sqrt(hd)

    # per-head column permutation: [0,2,4,...,hd-2, 1,3,5,...,hd-1]  (rotate-half layout)
    pat = np.concatenate([np.arange(0, hd, 2), np.arange(1, hd, 2)])
    head_perm = (np.arange(nh)[:, None] * hd + pat[None, :]).reshape(-1)          # (H,)
    perm = np.concatenate([head_perm, H + head_perm, 2 * H + np.arange(H)])       # (3H,)

    klayers = []
    for lp in params['layers']:
        wqkv_t = lp['wqkv'].T[:, perm]                 # (D, 3H), Q/K de-interleaved per head
        wqkv_t = wqkv_t.at[:, :H].multiply(scale)      # fold 1/sqrt(head_dim) into Q
        w1t, w3t = lp['w1'].T, lp['w3'].T              # (D, I) each
        w13 = jnp.concatenate([w1t.reshape(D, n_tiles, tile_i),
                               w3t.reshape(D, n_tiles, tile_i)],
                              axis=2).reshape(D, 2 * I)          # per-tile [w1_i | w3_i]
        klayers.append(dict(
            attn_norm=lp['attention_norm'][None, :],
            ffn_norm=lp['ffn_norm'][None, :],
            wqkv=wqkv_t.astype(jnp.bfloat16),
            wo=lp['wo'].T.astype(jnp.bfloat16),        # (H, D)
            w13=w13.astype(jnp.bfloat16),              # (D, 2I) tile-interleaved
            w2=lp['w2'].T.astype(jnp.bfloat16),        # (I, D)
        ))
    return dict(layers=klayers, tile_i=tile_i,
                final_norm=params['norm'][None, :],
                emb_t=params['emb'].T.astype(jnp.bfloat16))


def base_transformer_forward(inp, params, kparams, cfg, rope_tabs):
    """BaseTransformer.forward (key_padding_mask=None): returns (token_logits, hidden_states)."""
    cos_tab, sin_tab = rope_tabs
    x = embed(inp, params['emb'], params['cb_emb'],
              cfg['codebook_size'], cfg['num_codebooks'])
    x = x.astype(jnp.bfloat16)                 # bf16 residual stream between kernels
    for lp in kparams['layers']:
        h1 = run_attention_block(x, lp, cos_tab, sin_tab, cfg['n_head'], cfg['head_dim'])
        x = run_ffn_block(h1, lp, kparams['tile_i'])
    logits = run_norm_logits(x, kparams['final_norm'], kparams['emb_t'])  # tied embeddings
    return logits, x


# ---------------------------------------------------------------------------
# Pure-JAX float32 reference (mirrors the PyTorch module) for validation
# ---------------------------------------------------------------------------
def reference_forward(inp, params, cfg, cos_h, sin_h):
    nh, hd = cfg['n_head'], cfg['head_dim']
    H = nh * hd
    x = embed(inp, params['emb'], params['cb_emb'],
              cfg['codebook_size'], cfg['num_codebooks'])
    B, S, D = x.shape
    causal = jnp.tril(jnp.ones((S, S), bool))
    cos_h = cos_h.astype(jnp.float32)
    sin_h = sin_h.astype(jnp.float32)

    def rms(v, w):
        return v * jax.lax.rsqrt(jnp.mean(v * v, -1, keepdims=True) + EPS) * w

    def rope(t):                                                          # (B, S, nh, hd)
        ts = t.reshape(B, S, nh, hd // 2, 2)
        c = cos_h[None, :, None, :]
        s_ = sin_h[None, :, None, :]
        out = jnp.stack([ts[..., 0] * c - ts[..., 1] * s_,
                         ts[..., 1] * c + ts[..., 0] * s_], axis=-1)
        return out.reshape(B, S, nh, hd)

    for lp in params['layers']:
        hn = rms(x, lp['attention_norm'])
        qkv = hn @ lp['wqkv'].T
        q = qkv[..., :H].reshape(B, S, nh, hd)
        k = qkv[..., H:2 * H].reshape(B, S, nh, hd)
        v = qkv[..., 2 * H:].reshape(B, S, nh, hd)
        q, k = rope(q), rope(k)
        s = jnp.einsum('bqhk,bvhk->bhqv', q, k) / math.sqrt(hd)
        s = jnp.where(causal[None, None], s, -jnp.inf)
        p = jax.nn.softmax(s, axis=-1)
        o = jnp.einsum('bhqv,bvhk->bqhk', p, v).reshape(B, S, H)
        y = o @ lp['wo'].T
        h1 = x + y
        fn = rms(h1, lp['ffn_norm'])
        f = jax.nn.silu(fn @ lp['w1'].T) * (fn @ lp['w3'].T)
        x = h1 + f @ lp['w2'].T
    logits = rms(x, params['norm']) @ params['emb'].T
    return logits, x


# ---------------------------------------------------------------------------
if __name__ == "__main__":
    # TODO(synk): tokenizer semantic-token bookkeeping, KV cache / input_pos,
    #             key_padding_mask and gradient checkpointing are inference/training
    #             plumbing unused by this forward path; omitted.
    cfg = dict(vocab_size=384, n_layer=2, n_head=4, dim=32, head_dim=8,
               intermediate_size=384, codebook_size=16, num_codebooks=4)
    B, S = 2, 8

    key = jax.random.PRNGKey(0)
    kp, kt, kc = jax.random.split(key, 3)
    params = init_params(kp, cfg)
    tile_i = _pick_ffn_tile(cfg['intermediate_size'], cfg['dim'], VMEM_LIMIT)
    kparams = prepare_kernel_params(params, cfg, tile_i)
    rope_tabs = make_rope_tables(S, cfg['head_dim'])

    text_tokens = jax.random.randint(kt, (B, 1, S), 0, cfg['vocab_size'], dtype=jnp.int32)
    code_tokens = jax.random.randint(kc, (B, cfg['num_codebooks'], S), 0,
                                     cfg['codebook_size'], dtype=jnp.int32)
    code_tokens = code_tokens.at[:, :, 0].set(0)   # exercise the "codebook == 0" masking path
    inp = jnp.concatenate([text_tokens, code_tokens], axis=1)            # (B, 1+nc, S)

    logits, hidden = base_transformer_forward(inp, params, kparams, cfg, rope_tabs)
    jax.block_until_ready((logits, hidden))

    # Float32 reference matching the PyTorch module; kernels feed the MXU bf16 operands
    # and keep a bf16 residual stream, so tolerances are relaxed accordingly.
    with jax.default_matmul_precision("highest"):
        ref_logits, ref_hidden = reference_forward(inp, params, cfg, *rope_tabs)
        ref_logits, ref_hidden = jax.block_until_ready((ref_logits, ref_hidden))

    np.testing.assert_allclose(np.asarray(hidden.astype(jnp.float32)),
                               np.asarray(ref_hidden), rtol=5e-2, atol=8e-3)
    np.testing.assert_allclose(np.asarray(logits), np.asarray(ref_logits),
                               rtol=5e-2, atol=1e-2)
    assert logits.shape == (B, S, cfg['vocab_size'])
    assert hidden.shape == (B, S, cfg['dim'])

    print("KERNEL_OK")
</pallas_src>

<mosaic_0001>
module attributes {stable_mosaic.version = 11 : i64} {
  func.func @attention_block_kernel(%arg0: i32, %arg1: memref<1x8x32xbf16, #tpu.memory_space<vmem>>, %arg2: memref<8x4xbf16, #tpu.memory_space<vmem>>, %arg3: memref<8x4xbf16, #tpu.memory_space<vmem>>, %arg4: memref<1x32xf32, #tpu.memory_space<vmem>>, %arg5: memref<32x96xbf16, #tpu.memory_space<vmem>>, %arg6: memref<32x32xbf16, #tpu.memory_space<vmem>>, %arg7: memref<1x8x32xbf16, #tpu.memory_space<vmem>>, %arg8: memref<8x32xbf16, #tpu.memory_space<vmem>>) attributes {dimension_semantics = [#tpu.dimension_semantics<parallel>], iteration_bounds = array<i64: 2>, scalar_prefetch = 0 : i64, scratch_operands = 1 : i64, tpu.core_type = #tpu.core_type<tc>, window_params = [{transform_indices = @transform_0, window_bounds = array<i64: 1, 8, 32>}, {pipeline_mode = #tpu.pipeline_mode<synchronous>, transform_indices = @transform_1, window_bounds = array<i64: 8, 4>}, {pipeline_mode = #tpu.pipeline_mode<synchronous>, transform_indices = @transform_2, window_bounds = array<i64: 8, 4>}, {pipeline_mode = #tpu.pipeline_mode<synchronous>, transform_indices = @transform_3, window_bounds = array<i64: 1, 32>}, {pipeline_mode = #tpu.pipeline_mode<synchronous>, transform_indices = @transform_4, window_bounds = array<i64: 32, 96>}, {pipeline_mode = #tpu.pipeline_mode<synchronous>, transform_indices = @transform_5, window_bounds = array<i64: 32, 32>}, {transform_indices = @transform_6, window_bounds = array<i64: 1, 8, 32>}]} {
    %c0 = arith.constant 0 : index
    %c0_0 = arith.constant 0 : index
    %c0_1 = arith.constant 0 : index
    %0 = vector.load %arg1[%c0, %c0_0, %c0_1] : memref<1x8x32xbf16, #tpu.memory_space<vmem>>, vector<1x8x32xbf16>
    %1 = vector.shape_cast %0 : vector<1x8x32xbf16> to vector<8x32xbf16>
    %2 = arith.extf %1 : vector<8x32xbf16> to vector<8x32xf32>
    %c0_2 = arith.constant 0 : index
    %c0_3 = arith.constant 0 : index
    %3 = vector.load %arg4[%c0_2, %c0_3] : memref<1x32xf32, #tpu.memory_space<vmem>>, vector<1x32xf32>
    %4 = arith.mulf %2, %2 : vector<8x32xf32>
    %cst = arith.constant dense<0.000000e+00> : vector<8xf32>
    %5 = vector.multi_reduction <add>, %4, %cst [1] : vector<8x32xf32> to vector<8xf32>
    %6 = vector.shape_cast %5 : vector<8xf32> to vector<8x1xf32>
    %cst_4 = arith.constant 3.200000e+01 : f32
    %7 = vector.broadcast %cst_4 : f32 to vector<8x1xf32>
    %8 = arith.divf %6, %7 : vector<8x1xf32>
    %cst_5 = arith.constant 9.99999974E-6 : f32
    %9 = vector.broadcast %cst_5 : f32 to vector<8x1xf32>
    %10 = arith.addf %8, %9 : vector<8x1xf32>
    %11 = math.rsqrt %10 : vector<8x1xf32>
    %12 = vector.broadcast %11 : vector<8x1xf32> to vector<8x32xf32>
    %13 = arith.mulf %2, %12 : vector<8x32xf32>
    %14 = vector.broadcast %3 : vector<1x32xf32> to vector<8x32xf32>
    %15 = arith.mulf %13, %14 : vector<8x32xf32>
    %16 = arith.truncf %15 : vector<8x32xf32> to vector<8x32xbf16>
    %c0_6 = arith.constant 0 : index
    %c0_7 = arith.constant 0 : index
    %17 = vector.load %arg5[%c0_6, %c0_7] : memref<32x96xbf16, #tpu.memory_space<vmem>>, vector<32x96xbf16>
    %cst_8 = arith.constant dense<0.000000e+00> : vector<8x96xf32>
    %18 = tpu.matmul %16, %17, %cst_8 {dimension_numbers = #tpu.dot_dimension_numbers<[1], [0], [0], [1], [0, 0, 1, 1], [], []>} : vector<8x32xbf16>, vector<32x96xbf16>, vector<8x96xf32> -> vector<8x96xf32>
    %19 = vector.extract_strided_slice %18 {offsets = [0, 0], sizes = [8, 32], strides = [1, 1]} : vector<8x96xf32> to vector<8x32xf32>
    %20 = vector.extract_strided_slice %18 {offsets = [0, 32], sizes = [8, 32], strides = [1, 1]} : vector<8x96xf32> to vector<8x32xf32>
    %21 = vector.extract_strided_slice %18 {offsets = [0, 64], sizes = [8, 32], strides = [1, 1]} : vector<8x96xf32> to vector<8x32xf32>
    %c0_9 = arith.constant 0 : index
    %c0_10 = arith.constant 0 : index
    %22 = vector.load %arg2[%c0_9, %c0_10] : memref<8x4xbf16, #tpu.memory_space<vmem>>, vector<8x4xbf16>
    %23 = arith.extf %22 : vector<8x4xbf16> to vector<8x4xf32>
    %c0_11 = arith.constant 0 : index
    %c0_12 = arith.constant 0 : index
    %24 = vector.load %arg3[%c0_11, %c0_12] : memref<8x4xbf16, #tpu.memory_space<vmem>>, vector<8x4xbf16>
    %25 = arith.extf %24 : vector<8x4xbf16> to vector<8x4xf32>
    %26 = tpu.iota {dimensions = array<i32: 0>} : vector<8x8xi32>
    %27 = tpu.iota {dimensions = array<i32: 1>} : vector<8x8xi32>
    %28 = arith.cmpi sge, %26, %27 : vector<8x8xi32>
    %29 = vector.extract_strided_slice %19 {offsets = [0, 0], sizes = [8, 8], strides = [1, 1]} : vector<8x32xf32> to vector<8x8xf32>
    %30 = vector.extract_strided_slice %29 {offsets = [0, 0], sizes = [8, 4], strides = [1, 1]} : vector<8x8xf32> to vector<8x4xf32>
    %31 = vector.extract_strided_slice %29 {offsets = [0, 4], sizes = [8, 4], strides = [1, 1]} : vector<8x8xf32> to vector<8x4xf32>
    %32 = arith.mulf %30, %23 : vector<8x4xf32>
    %33 = arith.mulf %31, %25 : vector<8x4xf32>
    %34 = arith.subf %32, %33 : vector<8x4xf32>
    %35 = arith.mulf %31, %23 : vector<8x4xf32>
    %36 = arith.mulf %30, %25 : vector<8x4xf32>
    %37 = arith.addf %35, %36 : vector<8x4xf32>
    %38 = tpu.concatenate %34, %37 in 1 : vector<8x4xf32>, vector<8x4xf32> -> vector<8x8xf32>
    %39 = arith.truncf %38 : vector<8x8xf32> to vector<8x8xbf16>
    %40 = vector.extract_strided_slice %20 {offsets = [0, 0], sizes = [8, 8], strides = [1, 1]} : vector<8x32xf32> to vector<8x8xf32>
    %41 = vector.extract_strided_slice %40 {offsets = [0, 0], sizes = [8, 4], strides = [1, 1]} : vector<8x8xf32> to vector<8x4xf32>
    %42 = vector.extract_strided_slice %40 {offsets = [0, 4], sizes = [8, 4], strides = [1, 1]} : vector<8x8xf32> to vector<8x4xf32>
    %43 = arith.mulf %41, %23 : vector<8x4xf32>
    %44 = arith.mulf %42, %25 : vector<8x4xf32>
    %45 = arith.subf %43, %44 : vector<8x4xf32>
    %46 = arith.mulf %42, %23 : vector<8x4xf32>
    %47 = arith.mulf %41, %25 : vector<8x4xf32>
    %48 = arith.addf %46, %47 : vector<8x4xf32>
    %49 = tpu.concatenate %45, %48 in 1 : vector<8x4xf32>, vector<8x4xf32> -> vector<8x8xf32>
    %50 = arith.truncf %49 : vector<8x8xf32> to vector<8x8xbf16>
    %51 = vector.extract_strided_slice %21 {offsets = [0, 0], sizes = [8, 8], strides = [1, 1]} : vector<8x32xf32> to vector<8x8xf32>
    %52 = arith.truncf %51 : vector<8x8xf32> to vector<8x8xbf16>
    "tpu.trace_start"() <{level = 10 : i32, message = "qd,kd->qk"}> : () -> ()
    %cst_13 = arith.constant dense<0.000000e+00> : vector<8x8xf32>
    %53 = tpu.matmul %39, %50, %cst_13 {dimension_numbers = #tpu.dot_dimension_numbers<[1], [1], [0], [0], [0, 0, 1, 0], [], []>} : vector<8x8xbf16>, vector<8x8xbf16>, vector<8x8xf32> -> vector<8x8xf32>
    %cst_14 = arith.constant -1.000000e+30 : f32
    "tpu.trace_stop"() : () -> ()
    %54 = vector.broadcast %cst_14 : f32 to vector<8x8xf32>
    %55 = arith.select %28, %53, %54 : vector<8x8xi1>, vector<8x8xf32>
    %cst_15 = arith.constant dense<0xFF800000> : vector<8xf32>
    %56 = vector.multi_reduction <maximumf>, %55, %cst_15 [1] : vector<8x8xf32> to vector<8xf32>
    %57 = vector.shape_cast %56 : vector<8xf32> to vector<8x1xf32>
    %58 = vector.broadcast %57 : vector<8x1xf32> to vector<8x8xf32>
    %59 = arith.subf %55, %58 : vector<8x8xf32>
    %60 = math.exp %59 : vector<8x8xf32>
    %cst_16 = arith.constant dense<0.000000e+00> : vector<8xf32>
    %61 = vector.multi_reduction <add>, %60, %cst_16 [1] : vector<8x8xf32> to vector<8xf32>
    %62 = vector.shape_cast %61 : vector<8xf32> to vector<8x1xf32>
    %63 = tpu.reciprocal %62 {approx = true} : vector<8x1xf32> -> vector<8x1xf32>
    %64 = vector.broadcast %63 : vector<8x1xf32> to vector<8x8xf32>
    %65 = arith.mulf %60, %64 : vector<8x8xf32>
    %66 = arith.truncf %65 : vector<8x8xf32> to vector<8x8xbf16>
    %cst_17 = arith.constant dense<0.000000e+00> : vector<8x8xf32>
    %67 = tpu.matmul %66, %52, %cst_17 {dimension_numbers = #tpu.dot_dimension_numbers<[1], [0], [0], [1], [0, 0, 1, 1], [], []>} : vector<8x8xbf16>, vector<8x8xbf16>, vector<8x8xf32> -> vector<8x8xf32>
    %68 = arith.truncf %67 : vector<8x8xf32> to vector<8x8xbf16>
    %c0_18 = arith.constant 0 : index
    %c0_19 = arith.constant 0 : index
    %69 = vector.load %arg8[%c0_18, %c0_19] : memref<8x32xbf16, #tpu.memory_space<vmem>>, vector<8x8xbf16>
    tpu.vector_store %arg8[%c0_18, %c0_19], %68 {strides = array<i32>} : memref<8x32xbf16, #tpu.memory_space<vmem>>, vector<8x8xbf16>,
    %70 = vector.extract_strided_slice %19 {offsets = [0, 8], sizes = [8, 8], strides = [1, 1]} : vector<8x32xf32> to vector<8x8xf32>
    %71 = vector.extract_strided_slice %70 {offsets = [0, 0], sizes = [8, 4], strides = [1, 1]} : vector<8x8xf32> to vector<8x4xf32>
    %72 = vector.extract_strided_slice %70 {offsets = [0, 4], sizes = [8, 4], strides = [1, 1]} : vector<8x8xf32> to vector<8x4xf32>
    %73 = arith.mulf %71, %23 : vector<8x4xf32>
    %74 = arith.mulf %72, %25 : vector<8x4xf32>
    %75 = arith.subf %73, %74 : vector<8x4xf32>
    %76 = arith.mulf %72, %23 : vector<8x4xf32>
    %77 = arith.mulf %71, %25 : vector<8x4xf32>
    %78 = arith.addf %76, %77 : vector<8x4xf32>
    %79 = tpu.concatenate %75, %78 in 1 : vector<8x4xf32>, vector<8x4xf32> -> vector<8x8xf32>
    %80 = arith.truncf %79 : vector<8x8xf32> to vector<8x8xbf16>
    %81 = vector.extract_strided_slice %20 {offsets = [0, 8], sizes = [8, 8], strides = [1, 1]} : vector<8x32xf32> to vector<8x8xf32>
    %82 = vector.extract_strided_slice %81 {offsets = [0, 0], sizes = [8, 4], strides = [1, 1]} : vector<8x8xf32> to vector<8x4xf32>
    %83 = vector.extract_strided_slice %81 {offsets = [0, 4], sizes = [8, 4], strides = [1, 1]} : vector<8x8xf32> to vector<8x4xf32>
    %84 = arith.mulf %82, %23 : vector<8x4xf32>
    %85 = arith.mulf %83, %25 : vector<8x4xf32>
    %86 = arith.subf %84, %85 : vector<8x4xf32>
    %87 = arith.mulf %83, %23 : vector<8x4xf32>
    %88 = arith.mulf %82, %25 : vector<8x4xf32>
    %89 = arith.addf %87, %88 : vector<8x4xf32>
    %90 = tpu.concatenate %86, %89 in 1 : vector<8x4xf32>, vector<8x4xf32> -> vector<8x8xf32>
    %91 = arith.truncf %90 : vector<8x8xf32> to vector<8x8xbf16>
    %92 = vector.extract_strided_slice %21 {offsets = [0, 8], sizes = [8, 8], strides = [1, 1]} : vector<8x32xf32> to vector<8x8xf32>
    %93 = arith.truncf %92 : vector<8x8xf32> to vector<8x8xbf16>
    "tpu.trace_start"() <{level = 10 : i32, message = "qd,kd->qk"}> : () -> ()
    %cst_20 = arith.constant dense<0.000000e+00> : vector<8x8xf32>
    %94 = tpu.matmul %80, %91, %cst_20 {dimension_numbers = #tpu.dot_dimension_numbers<[1], [1], [0], [0], [0, 0, 1, 0], [], []>} : vector<8x8xbf16>, vector<8x8xbf16>, vector<8x8xf32> -> vector<8x8xf32>
    %cst_21 = arith.constant -1.000000e+30 : f32
    "tpu.trace_stop"() : () -> ()
    %95 = vector.broadcast %cst_21 : f32 to vector<8x8xf32>
    %96 = arith.select %28, %94, %95 : vector<8x8xi1>, vector<8x8xf32>
    %cst_22 = arith.constant dense<0xFF800000> : vector<8xf32>
    %97 = vector.multi_reduction <maximumf>, %96, %cst_22 [1] : vector<8x8xf32> to vector<8xf32>
    %98 = vector.shape_cast %97 : vector<8xf32> to vector<8x1xf32>
    %99 = vector.broadcast %98 : vector<8x1xf32> to vector<8x8xf32>
    %100 = arith.subf %96, %99 : vector<8x8xf32>
    %101 = math.exp %100 : vector<8x8xf32>
    %cst_23 = arith.constant dense<0.000000e+00> : vector<8xf32>
    %102 = vector.multi_reduction <add>, %101, %cst_23 [1] : vector<8x8xf32> to vector<8xf32>
    %103 = vector.shape_cast %102 : vector<8xf32> to vector<8x1xf32>
    %104 = tpu.reciprocal %103 {approx = true} : vector<8x1xf32> -> vector<8x1xf32>
    %105 = vector.broadcast %104 : vector<8x1xf32> to vector<8x8xf32>
    %106 = arith.mulf %101, %105 : vector<8x8xf32>
    %107 = arith.truncf %106 : vector<8x8xf32> to vector<8x8xbf16>
    %cst_24 = arith.constant dense<0.000000e+00> : vector<8x8xf32>
    %108 = tpu.matmul %107, %93, %cst_24 {dimension_numbers = #tpu.dot_dimension_numbers<[1], [0], [0], [1], [0, 0, 1, 1], [], []>} : vector<8x8xbf16>, vector<8x8xbf16>, vector<8x8xf32> -> vector<8x8xf32>
    %109 = arith.truncf %108 : vector<8x8xf32> to vector<8x8xbf16>
    %c0_25 = arith.constant 0 : index
    %c8 = arith.constant 8 : index
    %110 = vector.load %arg8[%c0_25, %c8] : memref<8x32xbf16, #tpu.memory_space<vmem>>, vector<8x8xbf16>
    tpu.vector_store %arg8[%c0_25, %c8], %109 {strides = array<i32>} : memref<8x32xbf16, #tpu.memory_space<vmem>>, vector<8x8xbf16>,
    %111 = vector.extract_strided_slice %19 {offsets = [0, 16], sizes = [8, 8], strides = [1, 1]} : vector<8x32xf32> to vector<8x8xf32>
    %112 = vector.extract_strided_slice %111 {offsets = [0, 0], sizes = [8, 4], strides = [1, 1]} : vector<8x8xf32> to vector<8x4xf32>
    %113 = vector.extract_strided_slice %111 {offsets = [0, 4], sizes = [8, 4], strides = [1, 1]} : vector<8x8xf32> to vector<8x4xf32>
    %114 = arith.mulf %112, %23 : vector<8x4xf32>
    %115 = arith.mulf %113, %25 : vector<8x4xf32>
    %116 = arith.subf %114, %115 : vector<8x4xf32>
    %117 = arith.mulf %113, %23 : vector<8x4xf32>
    %118 = arith.mulf %112, %25 : vector<8x4xf32>
    %119 = arith.addf %117, %118 : vector<8x4xf32>
    %120 = tpu.concatenate %116, %119 in 1 : vector<8x4xf32>, vector<8x4xf32> -> vector<8x8xf32>
    %121 = arith.truncf %120 : vector<8x8xf32> to vector<8x8xbf16>
    %122 = vector.extract_strided_slice %20 {offsets = [0, 16], sizes = [8, 8], strides = [1, 1]} : vector<8x32xf32> to vector<8x8xf32>
    %123 = vector.extract_strided_slice %122 {offsets = [0, 0], sizes = [8, 4], strides = [1, 1]} : vector<8x8xf32> to vector<8x4xf32>
    %124 = vector.extract_strided_slice %122 {offsets = [0, 4], sizes = [8, 4], strides = [1, 1]} : vector<8x8xf32> to vector<8x4xf32>
    %125 = arith.mulf %123, %23 : vector<8x4xf32>
    %126 = arith.mulf %124, %25 : vector<8x4xf32>
    %127 = arith.subf %125, %126 : vector<8x4xf32>
    %128 = arith.mulf %124, %23 : vector<8x4xf32>
    %129 = arith.mulf %123, %25 : vector<8x4xf32>
    %130 = arith.addf %128, %129 : vector<8x4xf32>
    %131 = tpu.concatenate %127, %130 in 1 : vector<8x4xf32>, vector<8x4xf32> -> vector<8x8xf32>
    %132 = arith.truncf %131 : vector<8x8xf32> to vector<8x8xbf16>
    %133 = vector.extract_strided_slice %21 {offsets = [0, 16], sizes = [8, 8], strides = [1, 1]} : vector<8x32xf32> to vector<8x8xf32>
    %134 = arith.truncf %133 : vector<8x8xf32> to vector<8x8xbf16>
    "tpu.trace_start"() <{level = 10 : i32, message = "qd,kd->qk"}> : () -> ()
    %cst_26 = arith.constant dense<0.000000e+00> : vector<8x8xf32>
    %135 = tpu.matmul %121, %132, %cst_26 {dimension_numbers = #tpu.dot_dimension_numbers<[1], [1], [0], [0], [0, 0, 1, 0], [], []>} : vector<8x8xbf16>, vector<8x8xbf16>, vector<8x8xf32> -> vector<8x8xf32>
    %cst_27 = arith.constant -1.000000e+30 : f32
    "tpu.trace_stop"() : () -> ()
    %136 = vector.broadcast %cst_27 : f32 to vector<8x8xf32>
    %137 = arith.select %28, %135, %136 : vector<8x8xi1>, vector<8x8xf32>
    %cst_28 = arith.constant dense<0xFF800000> : vector<8xf32>
    %138 = vector.multi_reduction <maximumf>, %137, %cst_28 [1] : vector<8x8xf32> to vector<8xf32>
    %139 = vector.shape_cast %138 : vector<8xf32> to vector<8x1xf32>
    %140 = vector.broadcast %139 : vector<8x1xf32> to vector<8x8xf32>
    %141 = arith.subf %137, %140 : vector<8x8xf32>
    %142 = math.exp %141 : vector<8x8xf32>
    %cst_29 = arith.constant dense<0.000000e+00> : vector<8xf32>
    %143 = vector.multi_reduction <add>, %142, %cst_29 [1] : vector<8x8xf32> to vector<8xf32>
    %144 = vector.shape_cast %143 : vector<8xf32> to vector<8x1xf32>
    %145 = tpu.reciprocal %144 {approx = true} : vector<8x1xf32> -> vector<8x1xf32>
    %146 = vector.broadcast %145 : vector<8x1xf32> to vector<8x8xf32>
    %147 = arith.mulf %142, %146 : vector<8x8xf32>
    %148 = arith.truncf %147 : vector<8x8xf32> to vector<8x8xbf16>
    %cst_30 = arith.constant dense<0.000000e+00> : vector<8x8xf32>
    %149 = tpu.matmul %148, %134, %cst_30 {dimension_numbers = #tpu.dot_dimension_numbers<[1], [0], [0], [1], [0, 0, 1, 1], [], []>} : vector<8x8xbf16>, vector<8x8xbf16>, vector<8x8xf32> -> vector<8x8xf32>
    %150 = arith.truncf %149 : vector<8x8xf32> to vector<8x8xbf16>
    %c0_31 = arith.constant 0 : index
    %c16 = arith.constant 16 : index
    %151 = vector.load %arg8[%c0_31, %c16] : memref<8x32xbf16, #tpu.memory_space<vmem>>, vector<8x8xbf16>
    tpu.vector_store %arg8[%c0_31, %c16], %150 {strides = array<i32>} : memref<8x32xbf16, #tpu.memory_space<vmem>>, vector<8x8xbf16>,
    %152 = vector.extract_strided_slice %19 {offsets = [0, 24], sizes = [8, 8], strides = [1, 1]} : vector<8x32xf32> to vector<8x8xf32>
    %153 = vector.extract_strided_slice %152 {offsets = [0, 0], sizes = [8, 4], strides = [1, 1]} : vector<8x8xf32> to vector<8x4xf32>
    %154 = vector.extract_strided_slice %152 {offsets = [0, 4], sizes = [8, 4], strides = [1, 1]} : vector<8x8xf32> to vector<8x4xf32>
    %155 = arith.mulf %153, %23 : vector<8x4xf32>
    %156 = arith.mulf %154, %25 : vector<8x4xf32>
    %157 = arith.subf %155, %156 : vector<8x4xf32>
    %158 = arith.mulf %154, %23 : vector<8x4xf32>
    %159 = arith.mulf %153, %25 : vector<8x4xf32>
    %160 = arith.addf %158, %159 : vector<8x4xf32>
    %161 = tpu.concatenate %157, %160 in 1 : vector<8x4xf32>, vector<8x4xf32> -> vector<8x8xf32>
    %162 = arith.truncf %161 : vector<8x8xf32> to vector<8x8xbf16>
    %163 = vector.extract_strided_slice %20 {offsets = [0, 24], sizes = [8, 8], strides = [1, 1]} : vector<8x32xf32> to vector<8x8xf32>
    %164 = vector.extract_strided_slice %163 {offsets = [0, 0], sizes = [8, 4], strides = [1, 1]} : vector<8x8xf32> to vector<8x4xf32>
    %165 = vector.extract_strided_slice %163 {offsets = [0, 4], sizes = [8, 4], strides = [1, 1]} : vector<8x8xf32> to vector<8x4xf32>
    %166 = arith.mulf %164, %23 : vector<8x4xf32>
    %167 = arith.mulf %165, %25 : vector<8x4xf32>
    %168 = arith.subf %166, %167 : vector<8x4xf32>
    %169 = arith.mulf %165, %23 : vector<8x4xf32>
    %170 = arith.mulf %164, %25 : vector<8x4xf32>
    %171 = arith.addf %169, %170 : vector<8x4xf32>
    %172 = tpu.concatenate %168, %171 in 1 : vector<8x4xf32>, vector<8x4xf32> -> vector<8x8xf32>
    %173 = arith.truncf %172 : vector<8x8xf32> to vector<8x8xbf16>
    %174 = vector.extract_strided_slice %21 {offsets = [0, 24], sizes = [8, 8], strides = [1, 1]} : vector<8x32xf32> to vector<8x8xf32>
    %175 = arith.truncf %174 : vector<8x8xf32> to vector<8x8xbf16>
    "tpu.trace_start"() <{level = 10 : i32, message = "qd,kd->qk"}> : () -> ()
    %cst_32 = arith.constant dense<0.000000e+00> : vector<8x8xf32>
    %176 = tpu.matmul %162, %173, %cst_32 {dimension_numbers = #tpu.dot_dimension_numbers<[1], [1], [0], [0], [0, 0, 1, 0], [], []>} : vector<8x8xbf16>, vector<8x8xbf16>, vector<8x8xf32> -> vector<8x8xf32>
    %cst_33 = arith.constant -1.000000e+30 : f32
    "tpu.trace_stop"() : () -> ()
    %177 = vector.broadcast %cst_33 : f32 to vector<8x8xf32>
    %178 = arith.select %28, %176, %177 : vector<8x8xi1>, vector<8x8xf32>
    %cst_34 = arith.constant dense<0xFF800000> : vector<8xf32>
    %179 = vector.multi_reduction <maximumf>, %178, %cst_34 [1] : vector<8x8xf32> to vector<8xf32>
    %180 = vector.shape_cast %179 : vector<8xf32> to vector<8x1xf32>
    %181 = vector.broadcast %180 : vector<8x1xf32> to vector<8x8xf32>
    %182 = arith.subf %178, %181 : vector<8x8xf32>
    %183 = math.exp %182 : vector<8x8xf32>
    %cst_35 = arith.constant dense<0.000000e+00> : vector<8xf32>
    %184 = vector.multi_reduction <add>, %183, %cst_35 [1] : vector<8x8xf32> to vector<8xf32>
    %185 = vector.shape_cast %184 : vector<8xf32> to vector<8x1xf32>
    %186 = tpu.reciprocal %185 {approx = true} : vector<8x1xf32> -> vector<8x1xf32>
    %187 = vector.broadcast %186 : vector<8x1xf32> to vector<8x8xf32>
    %188 = arith.mulf %183, %187 : vector<8x8xf32>
    %189 = arith.truncf %188 : vector<8x8xf32> to vector<8x8xbf16>
    %cst_36 = arith.constant dense<0.000000e+00> : vector<8x8xf32>
    %190 = tpu.matmul %189, %175, %cst_36 {dimension_numbers = #tpu.dot_dimension_numbers<[1], [0], [0], [1], [0, 0, 1, 1], [], []>} : vector<8x8xbf16>, vector<8x8xbf16>, vector<8x8xf32> -> vector<8x8xf32>
    %191 = arith.truncf %190 : vector<8x8xf32> to vector<8x8xbf16>
    %c0_37 = arith.constant 0 : index
    %c24 = arith.constant 24 : index
    %192 = vector.load %arg8[%c0_37, %c24] : memref<8x32xbf16, #tpu.memory_space<vmem>>, vector<8x8xbf16>
    tpu.vector_store %arg8[%c0_37, %c24], %191 {strides = array<i32>} : memref<8x32xbf16, #tpu.memory_space<vmem>>, vector<8x8xbf16>,
    %c0_38 = arith.constant 0 : index
    %c0_39 = arith.constant 0 : index
    %193 = vector.load %arg8[%c0_38, %c0_39] : memref<8x32xbf16, #tpu.memory_space<vmem>>, vector<8x32xbf16>
    %c0_40 = arith.constant 0 : index
    %c0_41 = arith.constant 0 : index
    %194 = vector.load %arg6[%c0_40, %c0_41] : memref<32x32xbf16, #tpu.memory_space<vmem>>, vector<32x32xbf16>
    %cst_42 = arith.constant dense<0.000000e+00> : vector<8x32xf32>
    %195 = tpu.matmul %193, %194, %cst_42 {dimension_numbers = #tpu.dot_dimension_numbers<[1], [0], [0], [1], [0, 0, 1, 1], [], []>} : vector<8x32xbf16>, vector<32x32xbf16>, vector<8x32xf32> -> vector<8x32xf32>
    %196 = arith.addf %2, %195 : vector<8x32xf32>
    %197 = vector.shape_cast %196 : vector<8x32xf32> to vector<1x8x32xf32>
    %198 = arith.truncf %197 : vector<1x8x32xf32> to vector<1x8x32xbf16>
    %c0_43 = arith.constant 0 : index
    %c0_44 = arith.constant 0 : index
    %c0_45 = arith.constant 0 : index
    %199 = vector.load %arg7[%c0_43, %c0_44, %c0_45] : memref<1x8x32xbf16, #tpu.memory_space<vmem>>, vector<1x8x32xbf16>
    tpu.vector_store %arg7[%c0_43, %c0_44, %c0_45], %198 {strides = array<i32>} : memref<1x8x32xbf16, #tpu.memory_space<vmem>>, vector<1x8x32xbf16>,
    return
  }
  func.func @transform_0(%arg0: i32) -> (i32, i32, i32) {
    %c0_i32 = arith.constant 0 : i32
    %c0_i32_0 = arith.constant 0 : i32
    %c0_i32_1 = arith.constant 0 : i32
    return %arg0, %c0_i32, %c0_i32_0 : i32, i32, i32
  }
  func.func @transform_1(%arg0: i32) -> (i32, i32) {
    %c0_i32 = arith.constant 0 : i32
    %c0_i32_0 = arith.constant 0 : i32
    %c0_i32_1 = arith.constant 0 : i32
    return %c0_i32, %c0_i32_0 : i32, i32
  }
  func.func @transform_2(%arg0: i32) -> (i32, i32) {
    %c0_i32 = arith.constant 0 : i32
    %c0_i32_0 = arith.constant 0 : i32
    %c0_i32_1 = arith.constant 0 : i32
    return %c0_i32, %c0_i32_0 : i32, i32
  }
  func.func @transform_3(%arg0: i32) -> (i32, i32) {
    %c0_i32 = arith.constant 0 : i32
    %c0_i32_0 = arith.constant 0 : i32
    %c0_i32_1 = arith.constant 0 : i32
    return %c0_i32, %c0_i32_0 : i32, i32
  }
  func.func @transform_4(%arg0: i32) -> (i32, i32) {
    %c0_i32 = arith.constant 0 : i32
    %c0_i32_0 = arith.constant 0 : i32
    %c0_i32_1 = arith.constant 0 : i32
    return %c0_i32, %c0_i32_0 : i32, i32
  }
  func.func @transform_5(%arg0: i32) -> (i32, i32) {
    %c0_i32 = arith.constant 0 : i32
    %c0_i32_0 = arith.constant 0 : i32
    %c0_i32_1 = arith.constant 0 : i32
    return %c0_i32, %c0_i32_0 : i32, i32
  }
  func.func @transform_6(%arg0: i32) -> (i32, i32, i32) {
    %c0_i32 = arith.constant 0 : i32
    %c0_i32_0 = arith.constant 0 : i32
    %c0_i32_1 = arith.constant 0 : i32
    return %arg0, %c0_i32, %c0_i32_0 : i32, i32, i32
  }
}

</mosaic_0001>

<llo_original>
// kernel: tpu_custom_call.1
$region0: #{tpu_custom_call.1}
  #allocation0 [shape = 'u32[]', space=smem, size = 0x4, offset = 0x4, fixed_abs, tag = 'smem constant byte address 0x4 - core index']
  #allocation1 [shape = 'u32[72,128]{1,0:T(1,128)}', space=vmem, size = 0x9000, scoped, tag = 'internal scratch']
  #allocation2 [shape = 'bf16[8,32]{1,0:T(8,128)(2,1)}', space=vmem, size = 0x800, scoped, tag = 'scratch operand']
  %s0 = inlined_call_operand.vmem [shape: bf16[2,8,32], index: 0, kind: input, shape index: {}]
  %s1 = inlined_call_operand.vmem [shape: bf16[8,4], index: 1, kind: input, shape index: {}]
  %s2 = inlined_call_operand.vmem [shape: bf16[8,4], index: 2, kind: input, shape index: {}]
  %s3 = inlined_call_operand.vmem [shape: f32[1,32], index: 3, kind: input, shape index: {}]
  %s4 = inlined_call_operand.hbm [shape: bf16[32,96], index: 4, kind: input, shape index: {}]
  %s5 = inlined_call_operand.hbm [shape: bf16[32,32], index: 5, kind: input, shape index: {}]
  %s6 = inlined_call_operand.hbm [shape: bf16[2,8,32], index: 6, kind: output, shape index: {}]
  %s7 = sld [smem:[#allocation0]]
  $region65: #{tpu_custom_call.1} parent=0
    _
  %s9 = ssub.s32 1, %s7
  %s10 = scalar_select 0, %s9, %s7
  $region1: #{tpu_custom_call.1} parent=0
    #allocation3 [shape = 'u8[8192]{0}', space=vmem, size = 0x2000, scoped, tag = 'input window, operand 4, single buffered']
    #allocation4 [shape = 's32[2]{0}', space=sflag, size = 0x8, scoped, tag = 'scoped memory for tpu_custom_call.1']
    #allocation5 [shape = 's32[2]{0}', space=sflag, size = 0x8, scoped, tag = 'scoped memory for tpu_custom_call.1']
    #allocation6 [shape = 'u8[8192]{0}', space=vmem, size = 0x2000, scoped, tag = 'input window, operand 5, single buffered']
    #allocation7 [shape = 's32[1]{0}', space=sflag, size = 0x4, scoped, tag = 'scoped memory for tpu_custom_call.1']
    #allocation8 [shape = 'u8[4096]{0}', space=vmem, size = 0x1000, scoped, tag = 'output window, operand 0']
    %11 = vsyncpa [#allocation4], 0
    %12 = vsyncpa [#allocation7], 0
    %13 = vsyncpa [#allocation5], 0
    %s14 = scalar_lea.sflag [#allocation5], 1
    %15 = vsyncpa %s14, 0
    loop: start=0, step=1, limit=4
    $region2: #{tpu_custom_call.1} parent=1 // loop_pre_header
      _
    $region3: #{tpu_custom_call.1} parent=1 // loop_header
      %s17 = sphi 0, %s21
      %p18 = scmp.ge.s32.totalorder %s17, 4
      %s27 = sphi 0, %s29
      %s30 = sphi 0, %s27
      %s31 = sphi 0, %s30
      %s47 = sphi 0, %s31
      %s51 = sphi 0, %s51
      %s53 = sphi 0, %s51
      %s54 = sphi 0, %s53
      %s68 = sphi 0, %s54
      %s72 = sphi 0, %s72
      %s74 = sphi 0, %s72
      %s75 = sphi 0, %s74
      %s89 = sphi 0, %s75
      %s93 = sphi 0, %s93
      %s95 = sphi 0, %s93
      %s96 = sphi 0, %s95
      %s110 = sphi 0, %s96
      %s114 = sphi 0, %s114
      %s116 = sphi 0, %s114
      %s117 = sphi 0, %s116
      %s131 = sphi 0, %s117
      %s135 = sphi 0, %s135
      %s137 = sphi 0, %s135
      %s138 = sphi 0, %s137
      %s152 = sphi 0, %s138
      %s158 = sphi 0, %s160
      %s161 = sphi 0, %s158
      %s162 = sphi 0, %s161
      %s178 = sphi 0, %s162
    $region4: #{tpu_custom_call.1} parent=1 // loop_header_branch
      %20 = sbr.rel (%p18) target = $region8
    $region5: #{tpu_custom_call.1} parent=1 // loop_body
      %s22 = ssub.s32 %s17, 1
      %s23 = ssub.s32 %s17, 2
      %s24 = sadd.s32 %s17, 1
      %s25 = ssub.s32 %s17, %s24
      %p26 = scmp.eq.s32.totalorder %s25, 0
      %s28 = sadd.s32 %s27, 1
      %s29 = scalar_select %p26, %s27, %s28
      %p32 = pneg %p26
      %p33 = scmp.eq.s32.totalorder %s17, 1
      %p34 = por %p32, %p33
      %p35 = scmp.ne.s32.totalorder %s27, %s30
      %p36 = scmp.eq.s32.totalorder %s17, 0
      %p37 = por %p35, %p36
      %p38 = scmp.ne.s32.totalorder %s27, %s30
      %p39 = scmp.eq.s32.totalorder %s22, 1
      %p40 = por %p38, %p39
      %p41 = scmp.ne.s32.totalorder %s30, %s31
      %p42 = scmp.eq.s32.totalorder %s22, 0
      %p43 = por %p41, %p42
      %p44 = scmp.ne.s32.totalorder %s30, %s31
      %p45 = scmp.eq.s32.totalorder %s23, 1
      %p46 = por %p44, %p45
      %p48 = scmp.ne.s32.totalorder %s31, %s47
      %p49 = scmp.eq.s32.totalorder %s23, 0
      %p50 = por %p48, %p49
      %s52 = sadd.s32 %s51, 1
      %p55 = scmp.eq.s32.totalorder %s17, 1
      %p56 = scmp.ne.s32.totalorder %s51, %s53
      %p57 = scmp.eq.s32.totalorder %s17, 0
      %p58 = por %p56, %p57
      %p59 = scmp.ne.s32.totalorder %s51, %s53
      %p60 = scmp.eq.s32.totalorder %s22, 1
      %p61 = por %p59, %p60
      %p62 = scmp.ne.s32.totalorder %s53, %s54
      %p63 = scmp.eq.s32.totalorder %s22, 0
      %p64 = por %p62, %p63
      %p65 = scmp.ne.s32.totalorder %s53, %s54
      %p66 = scmp.eq.s32.totalorder %s23, 1
      %p67 = por %p65, %p66
      %p69 = scmp.ne.s32.totalorder %s54, %s68
      %p70 = scmp.eq.s32.totalorder %s23, 0
      %p71 = por %p69, %p70
      %s73 = sadd.s32 %s72, 1
      %p76 = scmp.eq.s32.totalorder %s17, 1
      %p77 = scmp.ne.s32.totalorder %s72, %s74
      %p78 = scmp.eq.s32.totalorder %s17, 0
      %p79 = por %p77, %p78
      %p80 = scmp.ne.s32.totalorder %s72, %s74
      %p81 = scmp.eq.s32.totalorder %s22, 1
      %p82 = por %p80, %p81
      %p83 = scmp.ne.s32.totalorder %s74, %s75
      %p84 = scmp.eq.s32.totalorder %s22, 0
      %p85 = por %p83, %p84
      %p86 = scmp.ne.s32.totalorder %s74, %s75
      %p87 = scmp.eq.s32.totalorder %s23, 1
      %p88 = por %p86, %p87
      %p90 = scmp.ne.s32.totalorder %s75, %s89
      %p91 = scmp.eq.s32.totalorder %s23, 0
      %p92 = por %p90, %p91
      %s94 = sadd.s32 %s93, 1
      %p97 = scmp.eq.s32.totalorder %s17, 1
      %p98 = scmp.ne.s32.totalorder %s93, %s95
      %p99 = scmp.eq.s32.totalorder %s17, 0
      %p100 = por %p98, %p99
      %p101 = scmp.ne.s32.totalorder %s93, %s95
      %p102 = scmp.eq.s32.totalorder %s22, 1
      %p103 = por %p101, %p102
      %p104 = scmp.ne.s32.totalorder %s95, %s96
      %p105 = scmp.eq.s32.totalorder %s22, 0
      %p106 = por %p104, %p105
      %p107 = scmp.ne.s32.totalorder %s95, %s96
      %p108 = scmp.eq.s32.totalorder %s23, 1
      %p109 = por %p107, %p108
      %p111 = scmp.ne.s32.totalorder %s96, %s110
      %p112 = scmp.eq.s32.totalorder %s23, 0
      %p113 = por %p111, %p112
      %s115 = sadd.s32 %s114, 1
      %p118 = scmp.eq.s32.totalorder %s17, 1
      %p119 = scmp.ne.s32.totalorder %s114, %s116
      %p120 = scmp.eq.s32.totalorder %s17, 0
      %p121 = por %p119, %p120
      %p122 = scmp.ne.s32.totalorder %s114, %s116
      %p123 = scmp.eq.s32.totalorder %s22, 1
      %p124 = por %p122, %p123
      %p125 = scmp.ne.s32.totalorder %s116, %s117
      %p126 = scmp.eq.s32.totalorder %s22, 0
      %p127 = por %p125, %p126
      %p128 = scmp.ne.s32.totalorder %s116, %s117
      %p129 = scmp.eq.s32.totalorder %s23, 1
      %p130 = por %p128, %p129
      %p132 = scmp.ne.s32.totalorder %s117, %s131
      %p133 = scmp.eq.s32.totalorder %s23, 0
      %p134 = por %p132, %p133
      %s136 = sadd.s32 %s135, 1
      %p139 = scmp.eq.s32.totalorder %s17, 1
      %p140 = scmp.ne.s32.totalorder %s135, %s137
      %p141 = scmp.eq.s32.totalorder %s17, 0
      %p142 = por %p140, %p141
      %p143 = scmp.ne.s32.totalorder %s135, %s137
      %p144 = scmp.eq.s32.totalorder %s22, 1
      %p145 = por %p143, %p144
      %p146 = scmp.ne.s32.totalorder %s137, %s138
      %p147 = scmp.eq.s32.totalorder %s22, 0
      %p148 = por %p146, %p147
      %p149 = scmp.ne.s32.totalorder %s137, %s138
      %p150 = scmp.eq.s32.totalorder %s23, 1
      %p151 = por %p149, %p150
      %p153 = scmp.ne.s32.totalorder %s138, %s152
      %p154 = scmp.eq.s32.totalorder %s23, 0
      %p155 = por %p153, %p154
      %s156 = ssub.s32 %s17, %s24
      %p157 = scmp.eq.s32.totalorder %s156, 0
      %s159 = sadd.s32 %s158, 1
      %s160 = scalar_select %p157, %s158, %s159
      %p163 = pneg %p157
      %p164 = scmp.eq.s32.totalorder %s17, 1
      %p165 = por %p163, %p164
      %p166 = scmp.ne.s32.totalorder %s158, %s161
      %p167 = scmp.eq.s32.totalorder %s17, 0
      %p168 = por %p166, %p167
      %p169 = scmp.ne.s32.totalorder %s158, %s161
      %p170 = scmp.eq.s32.totalorder %s22, 1
      %p171 = por %p169, %p170
      %p172 = scmp.ne.s32.totalorder %s161, %s162
      %p173 = scmp.eq.s32.totalorder %s22, 0
      %p174 = por %p172, %p173
      %p175 = scmp.ne.s32.totalorder %s161, %s162
      %p176 = scmp.eq.s32.totalorder %s23, 1
      %p177 = por %p175, %p176
      %p179 = scmp.ne.s32.totalorder %s162, %s178
      %p180 = scmp.eq.s32.totalorder %s23, 0
      %p181 = por %p179, %p180
      %p182 = scmp.le.s32.totalorder 1, %s17
      %p183 = scmp.lt.s32.totalorder %s17, 3
      %p184 = pnand %p182, %p183
      %p185 = pneg %p184
      // Predicated region
      $region9: #{tpu_custom_call.1} parent=5 // pred_check
        _
      $region10: #{tpu_custom_call.1} parent=5 // pred_check_branch
        %187 = sbr.rel (%p184) target = $region12
      $region11: #{tpu_custom_call.1} parent=5 // pred_region
        %s188 = ssub.s32 %s17, 1
        // Predicated region
        $region13: #{tpu_custom_call.1} parent=11 // pred_check
          %p189 = pneg %p64
        $region14: #{tpu_custom_call.1} parent=11 // pred_check_branch
          %191 = sbr.rel (%p189) target = $region16
        $region15: #{tpu_custom_call.1} parent=11 // pred_region
          _
        $region16: #{tpu_custom_call.1} parent=11 // pred_fallthru
          _
        // Predicated region
        $region17: #{tpu_custom_call.1} parent=11 // pred_check
          %p192 = pneg %p85
        $region18: #{tpu_custom_call.1} parent=11 // pred_check_branch
          %194 = sbr.rel (%p192) target = $region20
        $region19: #{tpu_custom_call.1} parent=11 // pred_region
          _
        $region20: #{tpu_custom_call.1} parent=11 // pred_fallthru
          _
        // Predicated region
        $region21: #{tpu_custom_call.1} parent=11 // pred_check
          %p195 = pneg %p106
        $region22: #{tpu_custom_call.1} parent=11 // pred_check_branch
          %197 = sbr.rel (%p195) target = $region24
        $region23: #{tpu_custom_call.1} parent=11 // pred_region
          _
        $region24: #{tpu_custom_call.1} parent=11 // pred_fallthru
          _
        // Predicated region
        $region25: #{tpu_custom_call.1} parent=11 // pred_check
          %p198 = pneg %p127
        $region26: #{tpu_custom_call.1} parent=11 // pred_check_branch
          %200 = sbr.rel (%p198) target = $region28
        $region27: #{tpu_custom_call.1} parent=11 // pred_region
          %202 = vsyncadd [#allocation4], 0
          %s203 = sshll.u32 %s4, 4
          %s204 = int_to_ptr.hbm [resolvable:$true] %s203
          %s205 = sshll.u32 [#allocation3], 4
          %s206 = int_to_ptr.vmem [resolvable:$true] %s205
          %211 = dma.hbm_to_vmem [thread:$0]  %s204, 256, %s206, [#allocation4], 64, 64, 4
        $region28: #{tpu_custom_call.1} parent=11 // pred_fallthru
          _
        // Predicated region
        $region29: #{tpu_custom_call.1} parent=11 // pred_check
          %p212 = pneg %p148
        $region30: #{tpu_custom_call.1} parent=11 // pred_check_branch
          %214 = sbr.rel (%p212) target = $region32
        $region31: #{tpu_custom_call.1} parent=11 // pred_region
          %216 = vsyncadd [#allocation7], 0
          %s217 = sshll.u32 %s5, 4
          %s218 = int_to_ptr.hbm [resolvable:$true] %s217
          %s219 = sshll.u32 [#allocation6], 4
          %s220 = int_to_ptr.vmem [resolvable:$true] %s219
          %225 = dma.hbm_to_vmem [thread:$0]  %s218, 256, %s220, [#allocation7], 64, 64, 4
        $region32: #{tpu_custom_call.1} parent=11 // pred_fallthru
          _
      $region12: #{tpu_custom_call.1} parent=5 // pred_fallthru
        _
      %p226 = scmp.lt.s32.totalorder %s17, 2
      // Predicated region
      $region33: #{tpu_custom_call.1} parent=5 // pred_check
        %p227 = pneg %p226
      $region34: #{tpu_custom_call.1} parent=5 // pred_check_branch
        %229 = sbr.rel (%p227) target = $region36
      $region35: #{tpu_custom_call.1} parent=5 // pred_region
        // Predicated region
        $region37: #{tpu_custom_call.1} parent=35 // pred_check
          %p230 = pneg %p37
        $region38: #{tpu_custom_call.1} parent=35 // pred_check_branch
          %232 = sbr.rel (%p230) target = $region40
        $region39: #{tpu_custom_call.1} parent=35 // pred_region
          %p233 = scmp.lt.s32.totalorder %s17, 1
          %s234 = scalar_select %p233, %s17, 1
          %s235 = smul.addr %s234, 4
          %s236 = scalar_lea.vmem %s0, %s235
        $region40: #{tpu_custom_call.1} parent=35 // pred_fallthru
          _
      $region36: #{tpu_custom_call.1} parent=5 // pred_fallthru
        _
      %p237 = scmp.le.s32.totalorder 1, %s17
      %p238 = scmp.lt.s32.totalorder %s17, 3
      %p239 = pnand %p237, %p238
      %p240 = pneg %p239
      // Predicated region
      $region41: #{tpu_custom_call.1} parent=5 // pred_check
        _
      $region42: #{tpu_custom_call.1} parent=5 // pred_check_branch
        %242 = sbr.rel (%p239) target = $region44
      $region43: #{tpu_custom_call.1} parent=5 // pred_region
        %s243 = ssub.s32 %s17, 1
        // Predicated region
        $region45: #{tpu_custom_call.1} parent=43 // pred_check
          %p244 = pneg %p127
        $region46: #{tpu_custom_call.1} parent=43 // pred_check_branch
          %246 = sbr.rel (%p244) target = $region48
        $region47: #{tpu_custom_call.1} parent=43 // pred_region
          %248 = dma.done [#allocation4], 256
        $region48: #{tpu_custom_call.1} parent=43 // pred_fallthru
          _
        // Predicated region
        $region49: #{tpu_custom_call.1} parent=43 // pred_check
          %p249 = pneg %p148
        $region50: #{tpu_custom_call.1} parent=43 // pred_check_branch
          %251 = sbr.rel (%p249) target = $region52
        $region51: #{tpu_custom_call.1} parent=43 // pred_region
          %253 = dma.done [#allocation7], 256
        $region52: #{tpu_custom_call.1} parent=43 // pred_fallthru
          _
        %p254 = scmp.lt.s32.totalorder %s22, 1
        %s255 = scalar_select %p254, %s22, 1
        %s256 = smul.addr %s255, 4
        %s257 = scalar_lea.vmem %s0, %s256
        %p258 = pneg %p43
        %p259 = pneg %p40
        %p260 = pneg %p64
        %p261 = pneg %p61
        %p262 = pneg %p85
        %p263 = pneg %p82
        %p264 = pneg %p106
        %p265 = pneg %p103
        %p266 = pneg %p127
        %p267 = pneg %p124
        %p268 = pneg %p148
        %p269 = pneg %p145
        %p270 = pneg %p174
        %p271 = pneg %p171
        %s272 = sand.u32 %s161, 1
        %s273 = scalar_lea.sflag [#allocation5], %s272
        %s274 = sand.u32 %s161, 1
        %s275 = smul.addr %s274, 4
        %s276 = scalar_lea.vmem [#allocation8], %s275
        %p277 = scmp.lt.s32.totalorder %s22, 1
        %s278 = scalar_select %p277, %s22, 1
        %s279 = smul.addr %s278, 4
        %s280 = scalar_lea.vmem %s0, %s279
        %v282 = vld [vmem:[%s280] sm:$0xf]
        %v283 = vunpack.c.l.bf16 %v282
        %v284 = vld [vmem:[%s3] sm:$0x1]
        %v285 = vmul.f32 %v283, %v283
        %vm286 = vcmask 261120
        %v287 = vsel %vm286, %v285, 0.0
        %288 = vadd.xlane.f32.xlu0 %v287
        %v289 = vpop.xlane.xlu0 %288
        %v290 = vrcp.pop 32.0
        %v291 = vmul.f32 32.0, %v290
        %v292 = vsub.f32 1.0, %v291
        %v293 = vmul.f32 %v290, %v292
        %v294 = vadd.f32 %v290, %v293
        %vm295 = vweird.f32 %v290
        %v296 = vsel %vm295, %v290, %v294
        %v297 = vmul.f32 %v289, %v296
        %v298 = vadd.f32 %v297, 1e-05
        %v299 = vrsqrt.pop %v298
        %v300 = vmul.f32 %v299, %v298
        %v301 = vmul.f32 %v300, %v299
        %v302 = vmul.f32 0.5, %v301
        %v303 = vsub.f32 1.5, %v302
        %v304 = vmul.f32 %v299, %v303
        %vm305 = vweird.f32 %v298
        %vm306 = vweird.f32 %v299
        %vm307 = vmor %vm305, %vm306
        %v308 = vsel %vm307, %v299, %v304
        %v309 = vmul.f32 %v283, %v308
        %v311 = vperm.slane %v284, 0
        %v313 = vmul.f32 %v309, %v311
        %v314 = vpack.c.bf16 %v313, %v313
        %v315 = vld [vmem:[#allocation3] sm:$0xf]
        %v316 = vld [vmem:[#allocation3 + $0x4] sm:$0xf]
        %v317 = vld [vmem:[#allocation3 + $0x8] sm:$0xf]
        %v318 = vld [vmem:[#allocation3 + $0xc] sm:$0xf]
        %v323 = vunpack.c.l.b16 %v315
        %v324 = vunpack.c.l.b16 %v316
        %v325 = vunpack.c.l.b16 %v317
        %v326 = vunpack.c.l.b16 %v318
        %v327 = vpack.c.b16 %v324, %v323
        %v328 = vpack.c.b16 %v326, %v325
        %v332 = vsel %vm286, %v314, 0
        %334 = vmatpush.bf16.msra.mxu0 0
        %335 = vmatpush.bf16.msra.mxu0 0
        %336 = vmatpush.bf16.msra.mxu0 0
        %337 = vmatpush.bf16.msra.mxu0 0
        %338 = vmatpush.bf16.msra.mxu0 0
        %339 = vmatpush.bf16.msra.mxu0 0
        %340 = vmatpush.bf16.msra.mxu0 %v328
        %341 = vmatpush.bf16.msra.mxu0 %v327
        %342 = vmatmul.bf16.gmra.mxu0 %v332
        %v343 = vpop.f32.mrf.mxu0
        %v344 = vadd.f32 0.0, %v343
        %v345 = vpop.f32.mrf.mxu0
        %346 = vdwg.mxu0
        %v347 = vld [vmem:[%s1] sm:$0xf]
        %v348 = vunpack.c.l.bf16 %v347
        %v349 = vld [vmem:[%s2] sm:$0xf]
        %v350 = vunpack.c.l.bf16 %v349
        %v351 = vlaneseq
        %v352 = vshrl.u32 %v351, 7
        %v353 = vlaneseq
        %v354 = vand.u32 %v353, 127
        %vm355 = vcmp.ge.s32.totalorder %v352, %v354
        %v356 = vmul.f32 %v344, %v348
        %358 = vrot.lane.b32.xlu0 %v350, 4
        %v359 = vpop.permute.xlu0 %358
        %v361 = vmul.f32 %v344, %v359
        %363 = vrot.lane.b32.xlu0 %v361, 124
        %v364 = vpop.permute.xlu0 %363
        %v366 = vsub.f32 %v356, %v364
        %368 = vrot.lane.b32.xlu0 %v348, 4
        %v369 = vpop.permute.xlu0 %368
        %v371 = vmul.f32 %v344, %v369
        %v372 = vmul.f32 %v344, %v350
        %374 = vrot.lane.b32.xlu0 %v372, 4
        %v375 = vpop.permute.xlu0 %374
        %v377 = vadd.f32 %v371, %v375
        %vm378 = vcmask 31744
        %v379 = vsel %vm378, %v366, %v377
        %v380 = vpack.c.bf16 %v379, %v379
        %381 = vrot.lane.b32.xlu0 %v348, 32
        %v382 = vpop.permute.xlu0 %381
        %v384 = vmul.f32 %v344, %v382
        %385 = vrot.lane.b32.xlu0 %v350, 36
        %v386 = vpop.permute.xlu0 %385
        %v388 = vmul.f32 %v344, %v386
        %390 = vrot.lane.b32.xlu0 %v388, 124
        %v391 = vpop.permute.xlu0 %390
        %v393 = vsub.f32 %v384, %v391
        %394 = vrot.lane.b32.xlu0 %v348, 36
        %v395 = vpop.permute.xlu0 %394
        %v397 = vmul.f32 %v344, %v395
        %398 = vrot.lane.b32.xlu0 %v350, 32
        %v399 = vpop.permute.xlu0 %398
        %v401 = vmul.f32 %v344, %v399
        %403 = vrot.lane.b32.xlu0 %v401, 4
        %v404 = vpop.permute.xlu0 %403
        %v406 = vadd.f32 %v397, %v404
        %408 = vrot.lane.b32.xlu0 %v393, 96
        %v409 = vpop.permute.xlu0 %408
        %412 = vrot.lane.b32.xlu0 %v406, 96
        %v413 = vpop.permute.xlu0 %412
        %v415 = vsel %vm378, %v409, %v413
        %v416 = vpack.c.bf16 %v415, %v415
        %v417 = vpack.c.bf16 %v344, %v344
        %vm418 = vcmask 64512
        %v420 = vsel %vm418, %v380, 0
        %v423 = vsel %vm418, %v416, 0
        %425 = vmatpush.bf16.xpose.msra.mxu0 0
        %426 = vmatpush.bf16.xpose.msra.mxu0 0
        %427 = vmatpush.bf16.xpose.msra.mxu0 0
        %428 = vmatpush.bf16.xpose.msra.mxu0 0
        %429 = vmatpush.bf16.xpose.msra.mxu0 0
        %430 = vmatpush.bf16.xpose.msra.mxu0 0
        %431 = vmatpush.bf16.xpose.msra.mxu0 0
        %432 = vmatpush.bf16.xpose.msra.mxu0 %v423
        %433 = vmatmul.bf16.gmra.mxu0 %v420
        %v434 = vpop.f32.mrf.mxu0
        %v435 = vadd.f32 0.0, %v434
        %v436 = vpop.f32.mrf.mxu0
        %437 = vdwg.mxu0
        %v438 = vsel %vm355, %v435, -1e+30
        %v439 = vsel %vm418, %v438, -inf
        %440 = vmax.xlane.f32.xlu0 %v439
        %v441 = vpop.xlane.xlu0 %440
        %v442 = vsub.f32 %v438, %v441
        %v443 = vmul.f32 %v442, 1.442695
        %v444 = vpow.pop %v443
        %v445 = vsel %vm418, %v444, 0.0
        %446 = vadd.xlane.f32.xlu0 %v445
        %v447 = vpop.xlane.xlu0 %446
        %v448 = vrcp.pop %v447
        %v449 = vmul.f32 %v444, %v448
        %v450 = vpack.c.bf16 %v449, %v449
        %452 = vrot.lane.b32.xlu0 %v417, 64
        %v453 = vpop.permute.xlu0 %452
        %v455 = vsel %vm418, %v450, 0
        %vm457 = vcmask 1043456
        %v459 = vsel %vm457, %v453, 0
        %461 = vmatpush.bf16.msra.mxu0 0
        %462 = vmatpush.bf16.msra.mxu0 0
        %463 = vmatpush.bf16.msra.mxu0 0
        %464 = vmatpush.bf16.msra.mxu0 0
        %465 = vmatpush.bf16.msra.mxu0 0
        %466 = vmatpush.bf16.msra.mxu0 0
        %467 = vmatpush.bf16.msra.mxu0 0
        %468 = vmatpush.bf16.msra.mxu0 %v459
        %469 = vmatmul.bf16.gmra.mxu0 %v455
        %v470 = vpop.f32.mrf.mxu0
        %v471 = vadd.f32 0.0, %v470
        %v472 = vpop.f32.mrf.mxu0
        %473 = vdwg.mxu0
        %v474 = vpack.c.bf16 %v471, %v471
        %vm475 = vcmask 60416
        %476 = vst.msk [vmem:[#allocation2] sm:$0xf] %vm475, %v474
        %477 = vrot.lane.b32.xlu0 %v348, 8
        %v478 = vpop.permute.xlu0 %477
        %v480 = vmul.f32 %v344, %v478
        %481 = vrot.lane.b32.xlu0 %v350, 12
        %v482 = vpop.permute.xlu0 %481
        %v484 = vmul.f32 %v344, %v482
        %486 = vrot.lane.b32.xlu0 %v484, 124
        %v487 = vpop.permute.xlu0 %486
        %v489 = vsub.f32 %v480, %v487
        %490 = vrot.lane.b32.xlu0 %v348, 12
        %v491 = vpop.permute.xlu0 %490
        %v493 = vmul.f32 %v344, %v491
        %494 = vrot.lane.b32.xlu0 %v350, 8
        %v495 = vpop.permute.xlu0 %494
        %v497 = vmul.f32 %v344, %v495
        %499 = vrot.lane.b32.xlu0 %v497, 4
        %v500 = vpop.permute.xlu0 %499
        %v502 = vadd.f32 %v493, %v500
        %504 = vrot.lane.b32.xlu0 %v489, 120
        %v505 = vpop.permute.xlu0 %504
        %508 = vrot.lane.b32.xlu0 %v502, 120
        %v509 = vpop.permute.xlu0 %508
        %v511 = vsel %vm378, %v505, %v509
        %v512 = vpack.c.bf16 %v511, %v511
        %513 = vrot.lane.b32.xlu0 %v348, 40
        %v514 = vpop.permute.xlu0 %513
        %v516 = vmul.f32 %v344, %v514
        %517 = vrot.lane.b32.xlu0 %v350, 44
        %v518 = vpop.permute.xlu0 %517
        %v520 = vmul.f32 %v344, %v518
        %522 = vrot.lane.b32.xlu0 %v520, 124
        %v523 = vpop.permute.xlu0 %522
        %v525 = vsub.f32 %v516, %v523
        %526 = vrot.lane.b32.xlu0 %v348, 44
        %v527 = vpop.permute.xlu0 %526
        %v529 = vmul.f32 %v344, %v527
        %530 = vrot.lane.b32.xlu0 %v350, 40
        %v531 = vpop.permute.xlu0 %530
        %v533 = vmul.f32 %v344, %v531
        %535 = vrot.lane.b32.xlu0 %v533, 4
        %v536 = vpop.permute.xlu0 %535
        %v538 = vadd.f32 %v529, %v536
        %540 = vrot.lane.b32.xlu0 %v525, 88
        %v541 = vpop.permute.xlu0 %540
        %544 = vrot.lane.b32.xlu0 %v538, 88
        %v545 = vpop.permute.xlu0 %544
        %v547 = vsel %vm378, %v541, %v545
        %v548 = vpack.c.bf16 %v547, %v547
        %v550 = vsel %vm418, %v512, 0
        %v553 = vsel %vm418, %v548, 0
        %555 = vmatpush.bf16.xpose.msra.mxu0 0
        %556 = vmatpush.bf16.xpose.msra.mxu0 0
        %557 = vmatpush.bf16.xpose.msra.mxu0 0
        %558 = vmatpush.bf16.xpose.msra.mxu0 0
        %559 = vmatpush.bf16.xpose.msra.mxu0 0
        %560 = vmatpush.bf16.xpose.msra.mxu0 0
        %561 = vmatpush.bf16.xpose.msra.mxu0 0
        %562 = vmatpush.bf16.xpose.msra.mxu0 %v553
        %563 = vmatmul.bf16.gmra.mxu0 %v550
        %v564 = vpop.f32.mrf.mxu0
        %v565 = vadd.f32 0.0, %v564
        %v566 = vpop.f32.mrf.mxu0
        %567 = vdwg.mxu0
        %v568 = vsel %vm355, %v565, -1e+30
        %v569 = vsel %vm418, %v568, -inf
        %570 = vmax.xlane.f32.xlu0 %v569
        %v571 = vpop.xlane.xlu0 %570
        %v572 = vsub.f32 %v568, %v571
        %v573 = vmul.f32 %v572, 1.442695
        %v574 = vpow.pop %v573
        %v575 = vsel %vm418, %v574, 0.0
        %576 = vadd.xlane.f32.xlu0 %v575
        %v577 = vpop.xlane.xlu0 %576
        %v578 = vrcp.pop %v577
        %v579 = vmul.f32 %v574, %v578
        %v580 = vpack.c.bf16 %v579, %v579
        %581 = vrot.lane.b32.xlu0 %v417, 56
        %v582 = vpop.permute.xlu0 %581
        %v584 = vsel %vm418, %v580, 0
        %v587 = vsel %vm457, %v582, 0
        %589 = vmatpush.bf16.msra.mxu0 0
        %590 = vmatpush.bf16.msra.mxu0 0
        %591 = vmatpush.bf16.msra.mxu0 0
        %592 = vmatpush.bf16.msra.mxu0 0
        %593 = vmatpush.bf16.msra.mxu0 0
        %594 = vmatpush.bf16.msra.mxu0 0
        %595 = vmatpush.bf16.msra.mxu0 0
        %596 = vmatpush.bf16.msra.mxu0 %v587
        %597 = vmatmul.bf16.gmra.mxu0 %v584
        %v598 = vpop.f32.mrf.mxu0
        %v599 = vadd.f32 0.0, %v598
        %v600 = vpop.f32.mrf.mxu0
        %601 = vdwg.mxu0
        %v602 = vpack.c.bf16 %v599, %v599
        %604 = vrot.lane.b32.xlu0 %v602, 8
        %v605 = vpop.permute.xlu0 %604
        %vm607 = vcmask 126016
        %608 = vst.msk [vmem:[#allocation2] sm:$0xf] %vm607, %v605
        %609 = vrot.lane.b32.xlu0 %v348, 16
        %v610 = vpop.permute.xlu0 %609
        %v612 = vmul.f32 %v344, %v610
        %613 = vrot.lane.b32.xlu0 %v350, 20
        %v614 = vpop.permute.xlu0 %613
        %v616 = vmul.f32 %v344, %v614
        %618 = vrot.lane.b32.xlu0 %v616, 124
        %v619 = vpop.permute.xlu0 %618
        %v621 = vsub.f32 %v612, %v619
        %622 = vrot.lane.b32.xlu0 %v348, 20
        %v623 = vpop.permute.xlu0 %622
        %v625 = vmul.f32 %v344, %v623
        %626 = vrot.lane.b32.xlu0 %v350, 16
        %v627 = vpop.permute.xlu0 %626
        %v629 = vmul.f32 %v344, %v627
        %631 = vrot.lane.b32.xlu0 %v629, 4
        %v632 = vpop.permute.xlu0 %631
        %v634 = vadd.f32 %v625, %v632
        %636 = vrot.lane.b32.xlu0 %v621, 112
        %v637 = vpop.permute.xlu0 %636
        %640 = vrot.lane.b32.xlu0 %v634, 112
        %v641 = vpop.permute.xlu0 %640
        %v643 = vsel %vm378, %v637, %v641
        %v644 = vpack.c.bf16 %v643, %v643
        %645 = vrot.lane.b32.xlu0 %v348, 48
        %v646 = vpop.permute.xlu0 %645
        %v648 = vmul.f32 %v344, %v646
        %649 = vrot.lane.b32.xlu0 %v350, 52
        %v650 = vpop.permute.xlu0 %649
        %v652 = vmul.f32 %v344, %v650
        %654 = vrot.lane.b32.xlu0 %v652, 124
        %v655 = vpop.permute.xlu0 %654
        %v657 = vsub.f32 %v648, %v655
        %658 = vrot.lane.b32.xlu0 %v348, 52
        %v659 = vpop.permute.xlu0 %658
        %v661 = vmul.f32 %v344, %v659
        %662 = vrot.lane.b32.xlu0 %v350, 48
        %v663 = vpop.permute.xlu0 %662
        %v665 = vmul.f32 %v344, %v663
        %667 = vrot.lane.b32.xlu0 %v665, 4
        %v668 = vpop.permute.xlu0 %667
        %v670 = vadd.f32 %v661, %v668
        %672 = vrot.lane.b32.xlu0 %v657, 80
        %v673 = vpop.permute.xlu0 %672
        %676 = vrot.lane.b32.xlu0 %v670, 80
        %v677 = vpop.permute.xlu0 %676
        %v679 = vsel %vm378, %v673, %v677
        %v680 = vpack.c.bf16 %v679, %v679
        %v682 = vsel %vm418, %v644, 0
        %v685 = vsel %vm418, %v680, 0
        %687 = vmatpush.bf16.xpose.msra.mxu0 0
        %688 = vmatpush.bf16.xpose.msra.mxu0 0
        %689 = vmatpush.bf16.xpose.msra.mxu0 0
        %690 = vmatpush.bf16.xpose.msra.mxu0 0
        %691 = vmatpush.bf16.xpose.msra.mxu0 0
        %692 = vmatpush.bf16.xpose.msra.mxu0 0
        %693 = vmatpush.bf16.xpose.msra.mxu0 0
        %694 = vmatpush.bf16.xpose.msra.mxu0 %v685
        %695 = vmatmul.bf16.gmra.mxu0 %v682
        %v696 = vpop.f32.mrf.mxu0
        %v697 = vadd.f32 0.0, %v696
        %v698 = vpop.f32.mrf.mxu0
        %699 = vdwg.mxu0
        %v700 = vsel %vm355, %v697, -1e+30
        %v701 = vsel %vm418, %v700, -inf
        %702 = vmax.xlane.f32.xlu0 %v701
        %v703 = vpop.xlane.xlu0 %702
        %v704 = vsub.f32 %v700, %v703
        %v705 = vmul.f32 %v704, 1.442695
        %v706 = vpow.pop %v705
        %v707 = vsel %vm418, %v706, 0.0
        %708 = vadd.xlane.f32.xlu0 %v707
        %v709 = vpop.xlane.xlu0 %708
        %v710 = vrcp.pop %v709
        %v711 = vmul.f32 %v706, %v710
        %v712 = vpack.c.bf16 %v711, %v711
        %713 = vrot.lane.b32.xlu0 %v417, 48
        %v714 = vpop.permute.xlu0 %713
        %v716 = vsel %vm418, %v712, 0
        %v719 = vsel %vm457, %v714, 0
        %721 = vmatpush.bf16.msra.mxu0 0
        %722 = vmatpush.bf16.msra.mxu0 0
        %723 = vmatpush.bf16.msra.mxu0 0
        %724 = vmatpush.bf16.msra.mxu0 0
        %725 = vmatpush.bf16.msra.mxu0 0
        %726 = vmatpush.bf16.msra.mxu0 0
        %727 = vmatpush.bf16.msra.mxu0 0
        %728 = vmatpush.bf16.msra.mxu0 %v719
        %729 = vmatmul.bf16.gmra.mxu0 %v716
        %v730 = vpop.f32.mrf.mxu0
        %v731 = vadd.f32 0.0, %v730
        %v732 = vpop.f32.mrf.mxu0
        %733 = vdwg.mxu0
        %v734 = vpack.c.bf16 %v731, %v731
        %736 = vrot.lane.b32.xlu0 %v734, 16
        %v737 = vpop.permute.xlu0 %736
        %vm739 = vcmask 191616
        %740 = vst.msk [vmem:[#allocation2] sm:$0xf] %vm739, %v737
        %741 = vrot.lane.b32.xlu0 %v348, 24
        %v742 = vpop.permute.xlu0 %741
        %v744 = vmul.f32 %v344, %v742
        %745 = vrot.lane.b32.xlu0 %v350, 28
        %v746 = vpop.permute.xlu0 %745
        %v748 = vmul.f32 %v344, %v746
        %750 = vrot.lane.b32.xlu0 %v748, 124
        %v751 = vpop.permute.xlu0 %750
        %v753 = vsub.f32 %v744, %v751
        %754 = vrot.lane.b32.xlu0 %v348, 28
        %v755 = vpop.permute.xlu0 %754
        %v757 = vmul.f32 %v344, %v755
        %758 = vrot.lane.b32.xlu0 %v350, 24
        %v759 = vpop.permute.xlu0 %758
        %v761 = vmul.f32 %v344, %v759
        %763 = vrot.lane.b32.xlu0 %v761, 4
        %v764 = vpop.permute.xlu0 %763
        %v766 = vadd.f32 %v757, %v764
        %768 = vrot.lane.b32.xlu0 %v753, 104
        %v769 = vpop.permute.xlu0 %768
        %772 = vrot.lane.b32.xlu0 %v766, 104
        %v773 = vpop.permute.xlu0 %772
        %v775 = vsel %vm378, %v769, %v773
        %v776 = vpack.c.bf16 %v775, %v775
        %777 = vrot.lane.b32.xlu0 %v348, 56
        %v778 = vpop.permute.xlu0 %777
        %v780 = vmul.f32 %v344, %v778
        %781 = vrot.lane.b32.xlu0 %v350, 60
        %v782 = vpop.permute.xlu0 %781
        %v784 = vmul.f32 %v344, %v782
        %786 = vrot.lane.b32.xlu0 %v784, 124
        %v787 = vpop.permute.xlu0 %786
        %v789 = vsub.f32 %v780, %v787
        %790 = vrot.lane.b32.xlu0 %v348, 60
        %v791 = vpop.permute.xlu0 %790
        %v793 = vmul.f32 %v344, %v791
        %794 = vrot.lane.b32.xlu0 %v350, 56
        %v795 = vpop.permute.xlu0 %794
        %v797 = vmul.f32 %v344, %v795
        %799 = vrot.lane.b32.xlu0 %v797, 4
        %v800 = vpop.permute.xlu0 %799
        %v802 = vadd.f32 %v793, %v800
        %804 = vrot.lane.b32.xlu0 %v789, 72
        %v805 = vpop.permute.xlu0 %804
        %808 = vrot.lane.b32.xlu0 %v802, 72
        %v809 = vpop.permute.xlu0 %808
        %v811 = vsel %vm378, %v805, %v809
        %v812 = vpack.c.bf16 %v811, %v811
        %v814 = vsel %vm418, %v776, 0
        %v817 = vsel %vm418, %v812, 0
        %819 = vmatpush.bf16.xpose.msra.mxu0 0
        %820 = vmatpush.bf16.xpose.msra.mxu0 0
        %821 = vmatpush.bf16.xpose.msra.mxu0 0
        %822 = vmatpush.bf16.xpose.msra.mxu0 0
        %823 = vmatpush.bf16.xpose.msra.mxu0 0
        %824 = vmatpush.bf16.xpose.msra.mxu0 0
        %825 = vmatpush.bf16.xpose.msra.mxu0 0
        %826 = vmatpush.bf16.xpose.msra.mxu0 %v817
        %827 = vmatmul.bf16.gmra.mxu0 %v814
        %v828 = vpop.f32.mrf.mxu0
        %v829 = vadd.f32 0.0, %v828
        %v830 = vpop.f32.mrf.mxu0
        %831 = vdwg.mxu0
        %v832 = vsel %vm355, %v829, -1e+30
        %v833 = vsel %vm418, %v832, -inf
        %834 = vmax.xlane.f32.xlu0 %v833
        %v835 = vpop.xlane.xlu0 %834
        %v836 = vsub.f32 %v832, %v835
        %v837 = vmul.f32 %v836, 1.442695
        %v838 = vpow.pop %v837
        %v839 = vsel %vm418, %v838, 0.0
        %840 = vadd.xlane.f32.xlu0 %v839
        %v841 = vpop.xlane.xlu0 %840
        %v842 = vrcp.pop %v841
        %v843 = vmul.f32 %v838, %v842
        %v844 = vpack.c.bf16 %v843, %v843
        %845 = vrot.lane.b32.xlu0 %v417, 40
        %v846 = vpop.permute.xlu0 %845
        %v848 = vsel %vm418, %v844, 0
        %v851 = vsel %vm457, %v846, 0
        %853 = vmatpush.bf16.msra.mxu0 0
        %854 = vmatpush.bf16.msra.mxu0 0
        %855 = vmatpush.bf16.msra.mxu0 0
        %856 = vmatpush.bf16.msra.mxu0 0
        %857 = vmatpush.bf16.msra.mxu0 0
        %858 = vmatpush.bf16.msra.mxu0 0
        %859 = vmatpush.bf16.msra.mxu0 0
        %860 = vmatpush.bf16.msra.mxu0 %v851
        %861 = vmatmul.bf16.gmra.mxu0 %v848
        %v862 = vpop.f32.mrf.mxu0
        %v863 = vadd.f32 0.0, %v862
        %v864 = vpop.f32.mrf.mxu0
        %865 = vdwg.mxu0
        %v866 = vpack.c.bf16 %v863, %v863
        %868 = vrot.lane.b32.xlu0 %v866, 24
        %v869 = vpop.permute.xlu0 %868
        %vm871 = vcmask 257216
        %872 = vst.msk [vmem:[#allocation2] sm:$0xf] %vm871, %v869
        %v873 = vld [vmem:[#allocation2] sm:$0xf]
        %v874 = vld [vmem:[#allocation6] sm:$0xf]
        %v875 = vld [vmem:[#allocation6 + $0x4] sm:$0xf]
        %v876 = vld [vmem:[#allocation6 + $0x8] sm:$0xf]
        %v877 = vld [vmem:[#allocation6 + $0xc] sm:$0xf]
        %v882 = vunpack.c.l.b16 %v874
        %v883 = vunpack.c.l.b16 %v875
        %v884 = vunpack.c.l.b16 %v876
        %v885 = vunpack.c.l.b16 %v877
        %v886 = vpack.c.b16 %v883, %v882
        %v887 = vpack.c.b16 %v885, %v884
        %v891 = vsel %vm286, %v873, 0
        %893 = vmatpush.bf16.msra.mxu0 0
        %894 = vmatpush.bf16.msra.mxu0 0
        %895 = vmatpush.bf16.msra.mxu0 0
        %896 = vmatpush.bf16.msra.mxu0 0
        %897 = vmatpush.bf16.msra.mxu0 0
        %898 = vmatpush.bf16.msra.mxu0 0
        %899 = vmatpush.bf16.msra.mxu0 %v887
        %900 = vmatpush.bf16.msra.mxu0 %v886
        %901 = vmatmul.bf16.gmra.mxu0 %v891
        %v902 = vpop.f32.mrf.mxu0
        %v903 = vadd.f32 0.0, %v902
        %v904 = vpop.f32.mrf.mxu0
        %905 = vdwg.mxu0
        %v906 = vadd.f32 %v283, %v903
        %v907 = vpack.c.bf16 %v906, %v906
        %vm908 = vcmask 257024
        %909 = vst.msk [vmem:[%s276] sm:$0xf] %vm908, %v907
        %s910 = sand.u32 %s161, 1
        %s911 = scalar_lea.sflag [#allocation5], %s910
        %s912 = sand.u32 %s161, 1
        %s913 = smul.addr %s912, 4
        %s914 = scalar_lea.vmem [#allocation8], %s913
        // Predicated region
        $region53: #{tpu_custom_call.1} parent=43 // pred_check
          %p915 = pneg %p171
        $region54: #{tpu_custom_call.1} parent=43 // pred_check_branch
          %917 = sbr.rel (%p915) target = $region56
        $region55: #{tpu_custom_call.1} parent=43 // pred_region
          %919 = vsyncadd %s911, 0
          %s920 = smul.addr %s22, 4
          %s921 = scalar_lea.hbm %s6, %s920
          %s923 = sshll.u32 %s914, 4
          %s924 = int_to_ptr.vmem [resolvable:$true] %s923
          %s925 = sshll.u32 %s921, 4
          %s926 = int_to_ptr.hbm [resolvable:$true] %s925
          %928 = dma.vmem_to_hbm [thread:$0]  %s924, 64, %s926, %s911
        $region56: #{tpu_custom_call.1} parent=43 // pred_fallthru
          _
      $region44: #{tpu_custom_call.1} parent=5 // pred_fallthru
        _
      %p929 = scmp.le.s32.totalorder 2, %s17
      // Predicated region
      $region57: #{tpu_custom_call.1} parent=5 // pred_check
        %p930 = pneg %p929
      $region58: #{tpu_custom_call.1} parent=5 // pred_check_branch
        %932 = sbr.rel (%p930) target = $region60
      $region59: #{tpu_custom_call.1} parent=5 // pred_region
        %s933 = ssub.s32 %s17, 2
        // Predicated region
        $region61: #{tpu_custom_call.1} parent=59 // pred_check
          %p934 = pneg %p177
        $region62: #{tpu_custom_call.1} parent=59 // pred_check_branch
          %936 = sbr.rel (%p934) target = $region64
        $region63: #{tpu_custom_call.1} parent=59 // pred_region
          %s937 = sand.u32 %s162, 1
          %s938 = scalar_lea.sflag [#allocation5], %s937
          %s939 = sand.u32 %s162, 1
          %s940 = smul.addr %s939, 4
          %s941 = scalar_lea.vmem [#allocation8], %s940
          %943 = dma.done %s938, 64
        $region64: #{tpu_custom_call.1} parent=59 // pred_fallthru
          _
      $region60: #{tpu_custom_call.1} parent=5 // pred_fallthru
        _
    $region6: #{tpu_custom_call.1} parent=1 // loop_footer
      %s21 = sadd.s32 1, %s17
    $region7: #{tpu_custom_call.1} parent=1 // loop_footer_branch
      %16 = sbr.rel target = $region3
    $region8: #{tpu_custom_call.1} parent=1 // loop_exit
      _
    %944 = vsyncpa [#allocation4], 1
    %s945 = scalar_lea.sflag [#allocation4], 1
    %946 = vsyncpa %s945, 1
    %947 = vsyncpa [#allocation7], 1
    %948 = vsyncpa [#allocation5], 1
    %s949 = scalar_lea.sflag [#allocation5], 1
    %950 = vsyncpa %s949, 1

</llo_original>
